<compile_context>
chip_gen: v6e
topology: v6e:2x2x1
jax: 0.10.0
libtpu: 0.0.40
codegen_flags: <defaults>
</compile_context>

<pallas_src>
import functools

import jax
import jax.numpy as jnp
from jax.experimental import pallas as pl
from jax.experimental.pallas import tpu as pltpu


# --------------------------------------------------------------------------- #
# Kernels
# --------------------------------------------------------------------------- #
def _mlp_kernel(x_ref, w1_ref, b1_ref, w2_ref, b2_ref, o_ref):
    """Simple path: hidden activation materialized once per batch tile."""
    x = x_ref[...]
    h = jnp.dot(x, w1_ref[...], preferred_element_type=jnp.float32)
    h = jnp.maximum(h + b1_ref[...], 0.0)            # f32 bias + ReLU (VPU)
    h = h.astype(w2_ref.dtype)                        # no-op in the f32 path
    out = jnp.dot(h, w2_ref[...], preferred_element_type=jnp.float32)
    o_ref[...] = (out + b2_ref[...]).astype(o_ref.dtype)


def _mlp_kernel_hchunk(x_ref, w1_ref, b1_ref, w2_ref, b2_ref, o_ref, acc_ref,
                       *, h_chunk: int, n_chunks: int):
    """Large-H path: loop over hidden chunks, accumulate into f32 VMEM scratch."""
    x = x_ref[...]
    acc_ref[...] = jnp.zeros_like(acc_ref)

    def body(c, carry):
        start = pl.multiple_of(c * h_chunk, h_chunk)
        h = jnp.dot(x, w1_ref[:, pl.ds(start, h_chunk)],
                    preferred_element_type=jnp.float32)
        h = jnp.maximum(h + b1_ref[:, pl.ds(start, h_chunk)], 0.0)
        h = h.astype(w2_ref.dtype)
        acc_ref[...] += jnp.dot(h, w2_ref[pl.ds(start, h_chunk), :],
                                preferred_element_type=jnp.float32)
        return carry

    jax.lax.fori_loop(0, n_chunks, body, 0)
    o_ref[...] = (acc_ref[...] + b2_ref[...]).astype(o_ref.dtype)


# --------------------------------------------------------------------------- #
# Sizing helpers
# --------------------------------------------------------------------------- #
def _round_up(n: int, m: int) -> int:
    return (n + m - 1) // m * m


def _vmem_budget_bytes() -> int:
    """Generation-aware scoped-VMEM budget (leave compiler-scratch headroom)."""
    cap = 64 << 20
    try:
        cap = int(pltpu.get_tpu_info().vmem_capacity_bytes)
        if cap <= 0:
            cap = 64 << 20
    except Exception:
        pass
    if cap >= (96 << 20):                       # v5e / v6e: 128 MiB physical
        return min(cap - (24 << 20), 100 << 20)
    return min(cap - (8 << 20), 56 << 20)       # v7x-class: 64 MiB physical


def _select_tile_b(B: int, requested: int, per_row_bytes: int,
                   avail_bytes: int) -> int:
    """Batch-tile size: sublane-aligned, MXU-M aligned when large, >=2 grid
    steps when possible (v7x megacore), and fitting the VMEM budget."""
    requested = max(8, int(requested))
    if B <= 8:
        return B                                 # block == full dim (legal)
    # at least two grid steps so both v7x TensorCores get work
    tile = min(requested, _round_up(pl.cdiv(B, 2), 8))
    if tile >= 256:                              # MXU-native M on v6e/v7x
        tile -= tile % 256
    else:
        tile = _round_up(tile, 8)
    while tile > 8 and tile * per_row_bytes > avail_bytes:
        tile = max(8, _round_up(tile // 2, 8))
    return tile


# --------------------------------------------------------------------------- #
# Wrapper
# --------------------------------------------------------------------------- #
def mlp_forward(x, w1_t, b1, w2_t, b2, *, tile_b: int = 512, mxu_dtype=None,
                h_chunk: int = 512, h_chunk_threshold: int = 1024):
    """x: (B, D_in); w1_t: (D_in, H); b1: (H,); w2_t: (H, D_out); b2: (D_out,)
    -> (B, D_out).  mxu_dtype (e.g. jnp.bfloat16) casts the streamed x and the
    resident weights once in the wrapper; bias/ReLU/accumulation stay f32."""
    B, D_in = x.shape
    H = w1_t.shape[1]
    D_out = w2_t.shape[1]
    out_dtype = x.dtype

    op_dtype = jnp.dtype(mxu_dtype) if mxu_dtype is not None else jnp.dtype(x.dtype)
    x_op = x.astype(op_dtype)                    # cast streamed operand once
    w1 = w1_t.astype(op_dtype)
    w2 = w2_t.astype(op_dtype)
    b1r = b1.reshape(1, H).astype(jnp.float32)
    b2r = b2.reshape(1, D_out).astype(jnp.float32)

    # ---- hidden-dim chunking only for large H (weights padded, resident) ----
    h_chunk = _round_up(max(128, h_chunk), 128)
    chunked = H > h_chunk_threshold
    if chunked:
        H_pad = _round_up(H, h_chunk)
        if H_pad != H:                            # zero pad => exact result
            w1 = jnp.pad(w1, ((0, 0), (0, H_pad - H)))
            b1r = jnp.pad(b1r, ((0, 0), (0, H_pad - H)))
            w2 = jnp.pad(w2, ((0, H_pad - H), (0, 0)))
    else:
        H_pad = H

    # ---- VMEM sizing: weights counted ONCE (Buffered(1)), x/out twice --------
    xb = jnp.dtype(op_dtype).itemsize
    ob = jnp.dtype(out_dtype).itemsize
    wb = jnp.dtype(op_dtype).itemsize
    budget = _vmem_budget_bytes()
    resident = (D_in * H_pad + H_pad * D_out) * wb + (H_pad + D_out) * 4
    h_cols = min(H_pad, h_chunk) if chunked else H_pad
    per_row = (2 * D_in * xb + 2 * D_out * ob + h_cols * 4
               + D_out * 4 + (D_out * 4 if chunked else 0))
    avail = max(budget - resident - (4 << 20), 8 * per_row)
    TILE_B = _select_tile_b(B, tile_b, per_row, avail)
    num_tiles = pl.cdiv(B, TILE_B)               # partial last tile allowed

    cost = pl.CostEstimate(
        flops=2 * B * D_in * H_pad + 2 * B * H_pad * D_out,
        transcendentals=0,
        bytes_accessed=int(B * D_in * xb + B * D_out * ob
                           + (D_in * H_pad + H_pad * D_out) * wb
                           + (H_pad + D_out) * 4),
    )

    if chunked:
        kernel = functools.partial(_mlp_kernel_hchunk, h_chunk=h_chunk,
                                   n_chunks=H_pad // h_chunk)
        scratch = [pltpu.VMEM((TILE_B, D_out), jnp.float32)]
    else:
        kernel = _mlp_kernel
        scratch = []

    def build(weight_mode):
        def wspec(shape):
            if weight_mode is None:
                return pl.BlockSpec(shape, lambda i: (0, 0))
            return pl.BlockSpec(shape, lambda i: (0, 0), pipeline_mode=weight_mode)

        return pl.pallas_call(
            kernel,
            out_shape=jax.ShapeDtypeStruct((B, D_out), out_dtype),
            grid=(num_tiles,),
            in_specs=[
                pl.BlockSpec((TILE_B, D_in), lambda i: (i, 0)),   # x tile (streamed)
                wspec((D_in, H_pad)),                             # W1 (resident)
                wspec((1, H_pad)),                                # b1 (resident)
                wspec((H_pad, D_out)),                            # W2 (resident)
                wspec((1, D_out)),                                # b2 (resident)
            ],
            out_specs=pl.BlockSpec((TILE_B, D_out), lambda i: (i, 0)),
            scratch_shapes=scratch,
            compiler_params=pltpu.CompilerParams(
                dimension_semantics=("parallel",),
                vmem_limit_bytes=int(budget),
            ),
            cost_estimate=cost,
        )

    try:
        # Preferred: weights held single-buffered in VMEM (halves their footprint).
        return build(pl.Buffered(1))(x_op, w1, b1r, w2, b2r)
    except Exception:
        # Fallback for JAX builds that reject Buffered(1): default buffering.
        return build(None)(x_op, w1, b1r, w2, b2r)


# --------------------------------------------------------------------------- #
# Params / reference
# --------------------------------------------------------------------------- #
def init_mlp_params(key, input_dim, output_dim, dtype=jnp.float32):
    """Mimics torch.nn.Linear default init (U[-1/sqrt(fan_in), 1/sqrt(fan_in)])."""
    hidden = 3 * input_dim
    k1, k2, k3, k4 = jax.random.split(key, 4)
    bound1 = 1.0 / (input_dim ** 0.5)
    bound2 = 1.0 / (hidden ** 0.5)
    w1_t = jax.random.uniform(k1, (input_dim, hidden), dtype, -bound1, bound1)
    b1 = jax.random.uniform(k2, (hidden,), dtype, -bound1, bound1)
    w2_t = jax.random.uniform(k3, (hidden, output_dim), dtype, -bound2, bound2)
    b2 = jax.random.uniform(k4, (output_dim,), dtype, -bound2, bound2)
    return w1_t, b1, w2_t, b2


def mlp_reference(x, w1_t, b1, w2_t, b2):
    h = jnp.maximum(x @ w1_t + b1, 0.0)
    return h @ w2_t + b2


# TODO(synk): the surrounding AEFIN ops (rFFT top-k frequency filtering,
# nn.MultiheadAttention, FANLayer GELU / cos / sin gating) are left to XLA;
# only the MLP forward is implemented as a Pallas kernel.

if __name__ == "__main__":
    key = jax.random.PRNGKey(0)
    k = jax.random.split(key, 8)

    # --- 1) small case consistent with AEFIN: MLP(input_dim=seq_len+pred_len,
    #        output_dim=pred_len), applied over batch*enc_in rows ------------- #
    batch, enc_in, seq_len, pred_len = 2, 4, 16, 8
    D_in = seq_len + pred_len            # 24
    D_out = pred_len                     # 8
    B = batch * enc_in                   # 8

    x = jax.random.normal(k[0], (B, D_in), dtype=jnp.float32)
    params = init_mlp_params(k[1], D_in, D_out)
    out = jax.block_until_ready(mlp_forward(x, *params))
    ref = mlp_reference(x, *params)
    assert out.shape == (B, D_out)
    assert jnp.allclose(out, ref, atol=1e-5, rtol=1e-5), "small-case mismatch"

    # --- 2) larger case exercising the batch grid (2 tiles, megacore-split) --- #
    B2, D_in2, D_out2 = 1024, 128, 64
    x2 = jax.random.normal(k[2], (B2, D_in2), dtype=jnp.float32)
    params2 = init_mlp_params(k[3], D_in2, D_out2)
    out2 = jax.block_until_ready(mlp_forward(x2, *params2, tile_b=512))
    ref2 = mlp_reference(x2, *params2)
    assert out2.shape == (B2, D_out2)
    assert jnp.allclose(out2, ref2, atol=2e-3, rtol=2e-3), "tiled-case mismatch"

    # --- 3) bf16 MXU operands for the streamed tile (loose tolerance) --------- #
    out2_bf = jax.block_until_ready(
        mlp_forward(x2, *params2, tile_b=512, mxu_dtype=jnp.bfloat16))
    assert out2_bf.shape == (B2, D_out2)
    assert float(jnp.max(jnp.abs(out2_bf - ref2))) < 1e-1, "bf16-case mismatch"

    # --- 4) large hidden dim -> H-chunked path, plus a partial last batch tile - #
    B3, D_in3, D_out3 = 300, 512, 96
    x3 = jax.random.normal(k[4], (B3, D_in3), dtype=jnp.float32)
    params3 = init_mlp_params(k[5], D_in3, D_out3)
    out3 = jax.block_until_ready(mlp_forward(x3, *params3))
    ref3 = mlp_reference(x3, *params3)
    assert out3.shape == (B3, D_out3)
    assert jnp.allclose(out3, ref3, atol=5e-3, rtol=5e-3), "chunked-case mismatch"

    print("KERNEL_OK")
</pallas_src>

<mosaic_0001>
module attributes {stable_mosaic.version = 11 : i64} {
  func.func @_mlp_kernel(%arg0: i32, %arg1: memref<8x24xf32, #tpu.memory_space<vmem>>, %arg2: memref<24x72xf32, #tpu.memory_space<vmem>>, %arg3: memref<1x72xf32, #tpu.memory_space<vmem>>, %arg4: memref<72x8xf32, #tpu.memory_space<vmem>>, %arg5: memref<1x8xf32, #tpu.memory_space<vmem>>, %arg6: memref<8x8xf32, #tpu.memory_space<vmem>>) attributes {dimension_semantics = [#tpu.dimension_semantics<parallel>], iteration_bounds = array<i64: 1>, scalar_prefetch = 0 : i64, scratch_operands = 0 : i64, tpu.core_type = #tpu.core_type<tc>, window_params = [{transform_indices = @transform_0, window_bounds = array<i64: 8, 24>}, {pipeline_mode = #tpu.pipeline_mode<synchronous>, transform_indices = @transform_1, window_bounds = array<i64: 24, 72>}, {pipeline_mode = #tpu.pipeline_mode<synchronous>, transform_indices = @transform_2, window_bounds = array<i64: 1, 72>}, {pipeline_mode = #tpu.pipeline_mode<synchronous>, transform_indices = @transform_3, window_bounds = array<i64: 72, 8>}, {pipeline_mode = #tpu.pipeline_mode<synchronous>, transform_indices = @transform_4, window_bounds = array<i64: 1, 8>}, {transform_indices = @transform_5, window_bounds = array<i64: 8, 8>}]} {
    %c0 = arith.constant 0 : index
    %c0_0 = arith.constant 0 : index
    %0 = vector.load %arg1[%c0, %c0_0] : memref<8x24xf32, #tpu.memory_space<vmem>>, vector<8x24xf32>
    %c0_1 = arith.constant 0 : index
    %c0_2 = arith.constant 0 : index
    %1 = vector.load %arg2[%c0_1, %c0_2] : memref<24x72xf32, #tpu.memory_space<vmem>>, vector<24x72xf32>
    %cst = arith.constant dense<0.000000e+00> : vector<8x72xf32>
    %2 = tpu.matmul %0, %1, %cst {dimension_numbers = #tpu.dot_dimension_numbers<[1], [0], [0], [1], [0, 0, 1, 1], [], []>} : vector<8x24xf32>, vector<24x72xf32>, vector<8x72xf32> -> vector<8x72xf32>
    %c0_3 = arith.constant 0 : index
    %c0_4 = arith.constant 0 : index
    %3 = vector.load %arg3[%c0_3, %c0_4] : memref<1x72xf32, #tpu.memory_space<vmem>>, vector<1x72xf32>
    %4 = vector.broadcast %3 : vector<1x72xf32> to vector<8x72xf32>
    %5 = arith.addf %2, %4 : vector<8x72xf32>
    %cst_5 = arith.constant 0.000000e+00 : f32
    %6 = vector.broadcast %cst_5 : f32 to vector<8x72xf32>
    %7 = arith.maximumf %5, %6 : vector<8x72xf32>
    %c0_6 = arith.constant 0 : index
    %c0_7 = arith.constant 0 : index
    %8 = vector.load %arg4[%c0_6, %c0_7] : memref<72x8xf32, #tpu.memory_space<vmem>>, vector<72x8xf32>
    %cst_8 = arith.constant dense<0.000000e+00> : vector<8x8xf32>
    %9 = tpu.matmul %7, %8, %cst_8 {dimension_numbers = #tpu.dot_dimension_numbers<[1], [0], [0], [1], [0, 0, 1, 1], [], []>} : vector<8x72xf32>, vector<72x8xf32>, vector<8x8xf32> -> vector<8x8xf32>
    %c0_9 = arith.constant 0 : index
    %c0_10 = arith.constant 0 : index
    %10 = vector.load %arg5[%c0_9, %c0_10] : memref<1x8xf32, #tpu.memory_space<vmem>>, vector<1x8xf32>
    %11 = vector.broadcast %10 : vector<1x8xf32> to vector<8x8xf32>
    %12 = arith.addf %9, %11 : vector<8x8xf32>
    %c0_11 = arith.constant 0 : index
    %c0_12 = arith.constant 0 : index
    %13 = vector.load %arg6[%c0_11, %c0_12] : memref<8x8xf32, #tpu.memory_space<vmem>>, vector<8x8xf32>
    tpu.vector_store %arg6[%c0_11, %c0_12], %12 {strides = array<i32>} : memref<8x8xf32, #tpu.memory_space<vmem>>, vector<8x8xf32>,
    return
  }
  func.func @transform_0(%arg0: i32) -> (i32, i32) {
    %c0_i32 = arith.constant 0 : i32
    %c0_i32_0 = arith.constant 0 : i32
    return %arg0, %c0_i32 : i32, i32
  }
  func.func @transform_1(%arg0: i32) -> (i32, i32) {
    %c0_i32 = arith.constant 0 : i32
    %c0_i32_0 = arith.constant 0 : i32
    %c0_i32_1 = arith.constant 0 : i32
    return %c0_i32, %c0_i32_0 : i32, i32
  }
  func.func @transform_2(%arg0: i32) -> (i32, i32) {
    %c0_i32 = arith.constant 0 : i32
    %c0_i32_0 = arith.constant 0 : i32
    %c0_i32_1 = arith.constant 0 : i32
    return %c0_i32, %c0_i32_0 : i32, i32
  }
  func.func @transform_3(%arg0: i32) -> (i32, i32) {
    %c0_i32 = arith.constant 0 : i32
    %c0_i32_0 = arith.constant 0 : i32
    %c0_i32_1 = arith.constant 0 : i32
    return %c0_i32, %c0_i32_0 : i32, i32
  }
  func.func @transform_4(%arg0: i32) -> (i32, i32) {
    %c0_i32 = arith.constant 0 : i32
    %c0_i32_0 = arith.constant 0 : i32
    %c0_i32_1 = arith.constant 0 : i32
    return %c0_i32, %c0_i32_0 : i32, i32
  }
  func.func @transform_5(%arg0: i32) -> (i32, i32) {
    %c0_i32 = arith.constant 0 : i32
    %c0_i32_0 = arith.constant 0 : i32
    return %arg0, %c0_i32 : i32, i32
  }
}

module attributes {stable_mosaic.version = 11 : i64} {
  func.func @_mlp_kernel(%arg0: i32, %arg1: memref<8x24xf32, #tpu.memory_space<vmem>>, %arg2: memref<24x72xf32, #tpu.memory_space<vmem>>, %arg3: memref<1x72xf32, #tpu.memory_space<vmem>>, %arg4: memref<72x8xf32, #tpu.memory_space<vmem>>, %arg5: memref<1x8xf32, #tpu.memory_space<vmem>>, %arg6: memref<8x8xf32, #tpu.memory_space<vmem>>) attributes {dimension_semantics = [#tpu.dimension_semantics<parallel>], iteration_bounds = array<i64: 1>, scalar_prefetch = 0 : i64, scratch_operands = 0 : i64, tpu.core_type = #tpu.core_type<tc>, window_params = [{transform_indices = @transform_0, window_bounds = array<i64: 8, 24>}, {pipeline_mode = #tpu.pipeline_mode<synchronous>, transform_indices = @transform_1, window_bounds = array<i64: 24, 72>}, {pipeline_mode = #tpu.pipeline_mode<synchronous>, transform_indices = @transform_2, window_bounds = array<i64: 1, 72>}, {pipeline_mode = #tpu.pipeline_mode<synchronous>, transform_indices = @transform_3, window_bounds = array<i64: 72, 8>}, {pipeline_mode = #tpu.pipeline_mode<synchronous>, transform_indices = @transform_4, window_bounds = array<i64: 1, 8>}, {transform_indices = @transform_5, window_bounds = array<i64: 8, 8>}]} {
    %c0 = arith.constant 0 : index
    %c0_0 = arith.constant 0 : index
    %0 = vector.load %arg1[%c0, %c0_0] : memref<8x24xf32, #tpu.memory_space<vmem>>, vector<8x24xf32>
    %c0_1 = arith.constant 0 : index
    %c0_2 = arith.constant 0 : index
    %1 = vector.load %arg2[%c0_1, %c0_2] : memref<24x72xf32, #tpu.memory_space<vmem>>, vector<24x72xf32>
    %cst = arith.constant dense<0.000000e+00> : vector<8x72xf32>
    %2 = tpu.matmul %0, %1, %cst {dimension_numbers = #tpu.dot_dimension_numbers<[1], [0], [0], [1], [0, 0, 1, 1], [], []>} : vector<8x24xf32>, vector<24x72xf32>, vector<8x72xf32> -> vector<8x72xf32>
    %c0_3 = arith.constant 0 : index
    %c0_4 = arith.constant 0 : index
    %3 = vector.load %arg3[%c0_3, %c0_4] : memref<1x72xf32, #tpu.memory_space<vmem>>, vector<1x72xf32>
    %4 = vector.broadcast %3 : vector<1x72xf32> to vector<8x72xf32>
    %5 = arith.addf %2, %4 : vector<8x72xf32>
    %cst_5 = arith.constant 0.000000e+00 : f32
    %6 = vector.broadcast %cst_5 : f32 to vector<8x72xf32>
    %7 = arith.maximumf %5, %6 : vector<8x72xf32>
    %c0_6 = arith.constant 0 : index
    %c0_7 = arith.constant 0 : index
    %8 = vector.load %arg4[%c0_6, %c0_7] : memref<72x8xf32, #tpu.memory_space<vmem>>, vector<72x8xf32>
    %cst_8 = arith.constant dense<0.000000e+00> : vector<8x8xf32>
    %9 = tpu.matmul %7, %8, %cst_8 {dimension_numbers = #tpu.dot_dimension_numbers<[1], [0], [0], [1], [0, 0, 1, 1], [], []>} : vector<8x72xf32>, vector<72x8xf32>, vector<8x8xf32> -> vector<8x8xf32>
    %c0_9 = arith.constant 0 : index
    %c0_10 = arith.constant 0 : index
    %10 = vector.load %arg5[%c0_9, %c0_10] : memref<1x8xf32, #tpu.memory_space<vmem>>, vector<1x8xf32>
    %11 = vector.broadcast %10 : vector<1x8xf32> to vector<8x8xf32>
    %12 = arith.addf %9, %11 : vector<8x8xf32>
    %c0_11 = arith.constant 0 : index
    %c0_12 = arith.constant 0 : index
    %13 = vector.load %arg6[%c0_11, %c0_12] : memref<8x8xf32, #tpu.memory_space<vmem>>, vector<8x8xf32>
    tpu.vector_store %arg6[%c0_11, %c0_12], %12 {strides = array<i32>} : memref<8x8xf32, #tpu.memory_space<vmem>>, vector<8x8xf32>,
    return
  }
  func.func @transform_0(%arg0: i32) -> (i32, i32) {
    %c0_i32 = arith.constant 0 : i32
    %c0_i32_0 = arith.constant 0 : i32
    return %arg0, %c0_i32 : i32, i32
  }
  func.func @transform_1(%arg0: i32) -> (i32, i32) {
    %c0_i32 = arith.constant 0 : i32
    %c0_i32_0 = arith.constant 0 : i32
    %c0_i32_1 = arith.constant 0 : i32
    return %c0_i32, %c0_i32_0 : i32, i32
  }
  func.func @transform_2(%arg0: i32) -> (i32, i32) {
    %c0_i32 = arith.constant 0 : i32
    %c0_i32_0 = arith.constant 0 : i32
    %c0_i32_1 = arith.constant 0 : i32
    return %c0_i32, %c0_i32_0 : i32, i32
  }
  func.func @transform_3(%arg0: i32) -> (i32, i32) {
    %c0_i32 = arith.constant 0 : i32
    %c0_i32_0 = arith.constant 0 : i32
    %c0_i32_1 = arith.constant 0 : i32
    return %c0_i32, %c0_i32_0 : i32, i32
  }
  func.func @transform_4(%arg0: i32) -> (i32, i32) {
    %c0_i32 = arith.constant 0 : i32
    %c0_i32_0 = arith.constant 0 : i32
    %c0_i32_1 = arith.constant 0 : i32
    return %c0_i32, %c0_i32_0 : i32, i32
  }
  func.func @transform_5(%arg0: i32) -> (i32, i32) {
    %c0_i32 = arith.constant 0 : i32
    %c0_i32_0 = arith.constant 0 : i32
    return %arg0, %c0_i32 : i32, i32
  }
}

</mosaic_0001>

<llo_original>
// kernel: tpu_custom_call.1
$region0: #{tpu_custom_call.1}
  #allocation0 [shape = 'u32[]', space=smem, size = 0x4, offset = 0x4, fixed_abs, tag = 'smem constant byte address 0x4 - core index']
  #allocation1 [shape = 'u32[144,128]{1,0:T(1,128)}', space=vmem, size = 0x12000, scoped, tag = 'internal scratch']
  %s0 = inlined_call_operand.vmem [shape: f32[8,24], index: 0, kind: input, shape index: {}]
  %s1 = inlined_call_operand.vmem [shape: f32[24,72], index: 1, kind: input, shape index: {}]
  %s2 = inlined_call_operand.vmem [shape: f32[1,72], index: 2, kind: input, shape index: {}]
  %s3 = inlined_call_operand.vmem [shape: f32[72,8], index: 3, kind: input, shape index: {}]
  %s4 = inlined_call_operand.vmem [shape: f32[1,8], index: 4, kind: input, shape index: {}]
  %s5 = inlined_call_operand.hbm [shape: f32[8,8], index: 5, kind: output, shape index: {}]
  %s6 = sld [smem:[#allocation0]]
  $region30: #{tpu_custom_call.1} parent=0
    _
  %s8 = ssub.s32 1, %s6
  %s9 = scalar_select 0, %s8, %s6
  $region1: #{tpu_custom_call.1} parent=0
    #allocation2 [shape = 'u8[4096]{0}', space=vmem, size = 0x1000, scoped, tag = 'output window, operand 0, single buffered']
    #allocation3 [shape = 's32[1]{0}', space=sflag, size = 0x4, scoped, tag = 'scoped memory for tpu_custom_call.1']
    %10 = vsyncpa [#allocation3], 0
    // Predicated region
    $region2: #{tpu_custom_call.1} parent=1 // pred_check
      _
    $region3: #{tpu_custom_call.1} parent=1 // pred_check_branch
      %12 = sbr.rel (0) target = $region5
    $region4: #{tpu_custom_call.1} parent=1 // pred_region
      _
    $region5: #{tpu_custom_call.1} parent=1 // pred_fallthru
      _
    // Predicated region
    $region6: #{tpu_custom_call.1} parent=1 // pred_check
      _
    $region7: #{tpu_custom_call.1} parent=1 // pred_check_branch
      %14 = sbr.rel (0) target = $region9
    $region8: #{tpu_custom_call.1} parent=1 // pred_region
      _
    $region9: #{tpu_custom_call.1} parent=1 // pred_fallthru
      _
    // Predicated region
    $region10: #{tpu_custom_call.1} parent=1 // pred_check
      _
    $region11: #{tpu_custom_call.1} parent=1 // pred_check_branch
      %16 = sbr.rel (0) target = $region13
    $region12: #{tpu_custom_call.1} parent=1 // pred_region
      _
    $region13: #{tpu_custom_call.1} parent=1 // pred_fallthru
      _
    // Predicated region
    $region14: #{tpu_custom_call.1} parent=1 // pred_check
      _
    $region15: #{tpu_custom_call.1} parent=1 // pred_check_branch
      %18 = sbr.rel (0) target = $region17
    $region16: #{tpu_custom_call.1} parent=1 // pred_region
      _
    $region17: #{tpu_custom_call.1} parent=1 // pred_fallthru
      _
    // Predicated region
    $region18: #{tpu_custom_call.1} parent=1 // pred_check
      _
    $region19: #{tpu_custom_call.1} parent=1 // pred_check_branch
      %20 = sbr.rel (0) target = $region21
    $region20: #{tpu_custom_call.1} parent=1 // pred_region
      _
    $region21: #{tpu_custom_call.1} parent=1 // pred_fallthru
      _
    %v21 = vld [vmem:[%s0] sm:$0xff]
    %v22 = vld [vmem:[%s1] sm:$0xff]
    %v23 = vld [vmem:[%s1 + $0x8] sm:$0xff]
    %v24 = vld [vmem:[%s1 + $0x10] sm:$0xff]
    %v25 = vld [vmem:[%s2] sm:$0x1]
    %v27 = vlaneseq
    %v28 = vshrl.u32 %v27, 7
    %v29 = vsub.s32 0, %v28
    %v30 = vrot.slane %v25, %v29
    %vm32 = vcmask 195584
    %v34 = vsel %vm32, %v21, 0
    %36 = vmatprep.subr.mxu0 0.0
    %37 = vmatpush1.msra.mxu0 0.0
    %38 = vmatprep.subr.mxu0 0.0
    %39 = vmatpush1.msra.mxu0 0.0
    %40 = vmatprep.subr.mxu0 0.0
    %41 = vmatpush1.msra.mxu0 0.0
    %42 = vmatprep.subr.mxu0 0.0
    %43 = vmatpush1.msra.mxu0 0.0
    %44 = vmatprep.subr.mxu0 0.0
    %45 = vmatpush1.msra.mxu0 0.0
    %46 = vmatprep.subr.mxu0 0.0
    %47 = vmatpush1.msra.mxu0 0.0
    %48 = vmatprep.subr.mxu0 0.0
    %49 = vmatpush1.msra.mxu0 0.0
    %50 = vmatprep.subr.mxu0 0.0
    %51 = vmatpush1.msra.mxu0 0.0
    %52 = vmatprep.subr.mxu0 0.0
    %53 = vmatpush1.msra.mxu0 0.0
    %54 = vmatprep.subr.mxu0 0.0
    %55 = vmatpush1.msra.mxu0 0.0
    %56 = vmatprep.subr.mxu0 0.0
    %57 = vmatpush1.msra.mxu0 0.0
    %58 = vmatprep.subr.mxu0 0.0
    %59 = vmatpush1.msra.mxu0 0.0
    %60 = vmatprep.subr.mxu0 0.0
    %61 = vmatpush1.msra.mxu0 0.0
    %62 = vmatprep.subr.mxu0 0.0
    %63 = vmatpush1.msra.mxu0 %v24
    %64 = vmatprep.subr.mxu0 0.0
    %65 = vmatpush1.msra.mxu0 %v23
    %66 = vmatprep.subr.mxu0 0.0
    %67 = vmatpush1.msra.mxu0 %v22
    %68 = vmatprep.subr.mxu0 0.0
    %69 = vmatpush2.msra.mxu0 0.0
    %70 = vmatprep.subr.mxu0 0.0
    %71 = vmatpush2.msra.mxu0 0.0
    %72 = vmatprep.subr.mxu0 0.0
    %73 = vmatpush2.msra.mxu0 0.0
    %74 = vmatprep.subr.mxu0 0.0
    %75 = vmatpush2.msra.mxu0 0.0
    %76 = vmatprep.subr.mxu0 0.0
    %77 = vmatpush2.msra.mxu0 0.0
    %78 = vmatprep.subr.mxu0 0.0
    %79 = vmatpush2.msra.mxu0 0.0
    %80 = vmatprep.subr.mxu0 0.0
    %81 = vmatpush2.msra.mxu0 0.0
    %82 = vmatprep.subr.mxu0 0.0
    %83 = vmatpush2.msra.mxu0 0.0
    %84 = vmatprep.subr.mxu0 0.0
    %85 = vmatpush2.msra.mxu0 0.0
    %86 = vmatprep.subr.mxu0 0.0
    %87 = vmatpush2.msra.mxu0 0.0
    %88 = vmatprep.subr.mxu0 0.0
    %89 = vmatpush2.msra.mxu0 0.0
    %90 = vmatprep.subr.mxu0 0.0
    %91 = vmatpush2.msra.mxu0 0.0
    %92 = vmatprep.subr.mxu0 0.0
    %93 = vmatpush2.msra.mxu0 0.0
    %94 = vmatprep.subr.mxu0 0.0
    %95 = vmatpush2.msra.mxu0 0.0
    %96 = vmatprep.subr.mxu0 0.0
    %97 = vmatpush2.msra.mxu0 0.0
    %98 = vmatprep.subr.mxu0 0.0
    %99 = vmatpush2.msra.mxu0 0.0
    %100 = vmatprep.mubr.f32.mxu0 0.0
    %101 = vmatmul.mubr.f32.gmra.mxu0 %v34
    %v102 = vpop.f32.mrf.mxu0
    %v103 = vadd.f32 %v30, %v102
    %v104 = vpop.f32.mrf.mxu0
    %105 = vdwg.mxu0
    %v106 = vmax.f32 %v103, 0.0
    %v107 = vld [vmem:[%s3] sm:$0xff]
    %v108 = vld [vmem:[%s3 + $0x8] sm:$0xff]
    %v109 = vld [vmem:[%s3 + $0x10] sm:$0xff]
    %v110 = vld [vmem:[%s3 + $0x18] sm:$0xff]
    %v111 = vld [vmem:[%s3 + $0x20] sm:$0xff]
    %v112 = vld [vmem:[%s3 + $0x28] sm:$0xff]
    %v113 = vld [vmem:[%s3 + $0x30] sm:$0xff]
    %v114 = vld [vmem:[%s3 + $0x38] sm:$0xff]
    %v115 = vld [vmem:[%s3 + $0x40] sm:$0xff]
    %v116 = vld [vmem:[%s4] sm:$0x1]
    %v118 = vlaneseq
    %v119 = vshrl.u32 %v118, 7
    %v120 = vsub.s32 0, %v119
    %v121 = vrot.slane %v116, %v120
    %vm123 = vcmask 588800
    %v125 = vsel %vm123, %v106, 0
    %127 = vmatprep.subr.mxu0 0.0
    %128 = vmatpush1.msra.mxu0 0.0
    %129 = vmatprep.subr.mxu0 0.0
    %130 = vmatpush1.msra.mxu0 0.0
    %131 = vmatprep.subr.mxu0 0.0
    %132 = vmatpush1.msra.mxu0 0.0
    %133 = vmatprep.subr.mxu0 0.0
    %134 = vmatpush1.msra.mxu0 0.0
    %135 = vmatprep.subr.mxu0 0.0
    %136 = vmatpush1.msra.mxu0 0.0
    %137 = vmatprep.subr.mxu0 0.0
    %138 = vmatpush1.msra.mxu0 0.0
    %139 = vmatprep.subr.mxu0 0.0
    %140 = vmatpush1.msra.mxu0 0.0
    %141 = vmatprep.subr.mxu0 0.0
    %142 = vmatpush1.msra.mxu0 %v115
    %143 = vmatprep.subr.mxu0 0.0
    %144 = vmatpush1.msra.mxu0 %v114
    %145 = vmatprep.subr.mxu0 0.0
    %146 = vmatpush1.msra.mxu0 %v113
    %147 = vmatprep.subr.mxu0 0.0
    %148 = vmatpush1.msra.mxu0 %v112
    %149 = vmatprep.subr.mxu0 0.0
    %150 = vmatpush1.msra.mxu0 %v111
    %151 = vmatprep.subr.mxu0 0.0
    %152 = vmatpush1.msra.mxu0 %v110
    %153 = vmatprep.subr.mxu0 0.0
    %154 = vmatpush1.msra.mxu0 %v109
    %155 = vmatprep.subr.mxu0 0.0
    %156 = vmatpush1.msra.mxu0 %v108
    %157 = vmatprep.subr.mxu0 0.0
    %158 = vmatpush1.msra.mxu0 %v107
    %159 = vmatprep.subr.mxu0 0.0
    %160 = vmatpush2.msra.mxu0 0.0
    %161 = vmatprep.subr.mxu0 0.0
    %162 = vmatpush2.msra.mxu0 0.0
    %163 = vmatprep.subr.mxu0 0.0
    %164 = vmatpush2.msra.mxu0 0.0
    %165 = vmatprep.subr.mxu0 0.0
    %166 = vmatpush2.msra.mxu0 0.0
    %167 = vmatprep.subr.mxu0 0.0
    %168 = vmatpush2.msra.mxu0 0.0
    %169 = vmatprep.subr.mxu0 0.0
    %170 = vmatpush2.msra.mxu0 0.0
    %171 = vmatprep.subr.mxu0 0.0
    %172 = vmatpush2.msra.mxu0 0.0
    %173 = vmatprep.subr.mxu0 0.0
    %174 = vmatpush2.msra.mxu0 0.0
    %175 = vmatprep.subr.mxu0 0.0
    %176 = vmatpush2.msra.mxu0 0.0
    %177 = vmatprep.subr.mxu0 0.0
    %178 = vmatpush2.msra.mxu0 0.0
    %179 = vmatprep.subr.mxu0 0.0
    %180 = vmatpush2.msra.mxu0 0.0
    %181 = vmatprep.subr.mxu0 0.0
    %182 = vmatpush2.msra.mxu0 0.0
    %183 = vmatprep.subr.mxu0 0.0
    %184 = vmatpush2.msra.mxu0 0.0
    %185 = vmatprep.subr.mxu0 0.0
    %186 = vmatpush2.msra.mxu0 0.0
    %187 = vmatprep.subr.mxu0 0.0
    %188 = vmatpush2.msra.mxu0 0.0
    %189 = vmatprep.subr.mxu0 0.0
    %190 = vmatpush2.msra.mxu0 0.0
    %191 = vmatprep.mubr.f32.mxu0 0.0
    %192 = vmatmul.mubr.f32.gmra.mxu0 %v125
    %v193 = vpop.f32.mrf.mxu0
    %v194 = vadd.f32 %v121, %v193
    %v195 = vpop.f32.mrf.mxu0
    %196 = vdwg.mxu0
    %vm197 = vcmask 64512
    %198 = vst.msk [vmem:[#allocation2] sm:$0xff] %vm197, %v194
    // Predicated region
    $region22: #{tpu_custom_call.1} parent=1 // pred_check
      _
    $region23: #{tpu_custom_call.1} parent=1 // pred_check_branch
      %200 = sbr.rel (0) target = $region25
    $region24: #{tpu_custom_call.1} parent=1 // pred_region
      %s202 = ssub.s32 128, 128
      %203 = vsyncadd [#allocation3], %s202
      %s205 = sshll.u32 [#allocation2], 4
      %s206 = int_to_ptr.vmem [resolvable:$true] %s205
      %208 = dma.vmem_to_hbm [thread:$0]  %s206, 128, %s5, [#allocation3]
    $region25: #{tpu_custom_call.1} parent=1 // pred_fallthru
      _
    // Predicated region
    $region26: #{tpu_custom_call.1} parent=1 // pred_check
      _
    $region27: #{tpu_custom_call.1} parent=1 // pred_check_branch
      %210 = sbr.rel (0) target = $region29
    $region28: #{tpu_custom_call.1} parent=1 // pred_region
      %211 = dma.done [#allocation3], 128
    $region29: #{tpu_custom_call.1} parent=1 // pred_fallthru
      _
    %212 = vsyncpa [#allocation3], 1

// kernel: tpu_custom_call.1
$region0: #{tpu_custom_call.1}
  #allocation0 [shape = 'u32[]', space=smem, size = 0x4, offset = 0x4, fixed_abs, tag = 'smem constant byte address 0x4 - core index']
  #allocation1 [shape = 'u32[144,128]{1,0:T(1,128)}', space=vmem, size = 0x12000, scoped, tag = 'internal scratch']
  %s0 = inlined_call_operand.vmem [shape: f32[8,24], index: 0, kind: input, shape index: {}]
  %s1 = inlined_call_operand.vmem [shape: f32[24,72], index: 1, kind: input, shape index: {}]
  %s2 = inlined_call_operand.vmem [shape: f32[1,72], index: 2, kind: input, shape index: {}]
  %s3 = inlined_call_operand.vmem [shape: f32[72,8], index: 3, kind: input, shape index: {}]
  %s4 = inlined_call_operand.vmem [shape: f32[1,8], index: 4, kind: input, shape index: {}]
  %s5 = inlined_call_operand.hbm [shape: f32[8,8], index: 5, kind: output, shape index: {}]
  %s6 = sld [smem:[#allocation0]]
  $region30: #{tpu_custom_call.1} parent=0
    _
  %s8 = ssub.s32 1, %s6
  %s9 = scalar_select 0, %s8, %s6
  $region1: #{tpu_custom_call.1} parent=0
    #allocation2 [shape = 'u8[4096]{0}', space=vmem, size = 0x1000, scoped, tag = 'output window, operand 0, single buffered']
    #allocation3 [shape = 's32[1]{0}', space=sflag, size = 0x4, scoped, tag = 'scoped memory for tpu_custom_call.1']
    %10 = vsyncpa [#allocation3], 0
    // Predicated region
    $region2: #{tpu_custom_call.1} parent=1 // pred_check
      _
    $region3: #{tpu_custom_call.1} parent=1 // pred_check_branch
      %12 = sbr.rel (0) target = $region5
    $region4: #{tpu_custom_call.1} parent=1 // pred_region
      _
    $region5: #{tpu_custom_call.1} parent=1 // pred_fallthru
      _
    // Predicated region
    $region6: #{tpu_custom_call.1} parent=1 // pred_check
      _
    $region7: #{tpu_custom_call.1} parent=1 // pred_check_branch
      %14 = sbr.rel (0) target = $region9
    $region8: #{tpu_custom_call.1} parent=1 // pred_region
      _
    $region9: #{tpu_custom_call.1} parent=1 // pred_fallthru
      _
    // Predicated region
    $region10: #{tpu_custom_call.1} parent=1 // pred_check
      _
    $region11: #{tpu_custom_call.1} parent=1 // pred_check_branch
      %16 = sbr.rel (0) target = $region13
    $region12: #{tpu_custom_call.1} parent=1 // pred_region
      _
    $region13: #{tpu_custom_call.1} parent=1 // pred_fallthru
      _
    // Predicated region
    $region14: #{tpu_custom_call.1} parent=1 // pred_check
      _
    $region15: #{tpu_custom_call.1} parent=1 // pred_check_branch
      %18 = sbr.rel (0) target = $region17
    $region16: #{tpu_custom_call.1} parent=1 // pred_region
      _
    $region17: #{tpu_custom_call.1} parent=1 // pred_fallthru
      _
    // Predicated region
    $region18: #{tpu_custom_call.1} parent=1 // pred_check
      _
    $region19: #{tpu_custom_call.1} parent=1 // pred_check_branch
      %20 = sbr.rel (0) target = $region21
    $region20: #{tpu_custom_call.1} parent=1 // pred_region
      _
    $region21: #{tpu_custom_call.1} parent=1 // pred_fallthru
      _
    %v21 = vld [vmem:[%s0] sm:$0xff]
    %v22 = vld [vmem:[%s1] sm:$0xff]
    %v23 = vld [vmem:[%s1 + $0x8] sm:$0xff]
    %v24 = vld [vmem:[%s1 + $0x10] sm:$0xff]
    %v25 = vld [vmem:[%s2] sm:$0x1]
    %v27 = vlaneseq
    %v28 = vshrl.u32 %v27, 7
    %v29 = vsub.s32 0, %v28
    %v30 = vrot.slane %v25, %v29
    %vm32 = vcmask 195584
    %v34 = vsel %vm32, %v21, 0
    %36 = vmatprep.subr.mxu0 0.0
    %37 = vmatpush1.msra.mxu0 0.0
    %38 = vmatprep.subr.mxu0 0.0
    %39 = vmatpush1.msra.mxu0 0.0
    %40 = vmatprep.subr.mxu0 0.0
    %41 = vmatpush1.msra.mxu0 0.0
    %42 = vmatprep.subr.mxu0 0.0
    %43 = vmatpush1.msra.mxu0 0.0
    %44 = vmatprep.subr.mxu0 0.0
    %45 = vmatpush1.msra.mxu0 0.0
    %46 = vmatprep.subr.mxu0 0.0
    %47 = vmatpush1.msra.mxu0 0.0
    %48 = vmatprep.subr.mxu0 0.0
    %49 = vmatpush1.msra.mxu0 0.0
    %50 = vmatprep.subr.mxu0 0.0
    %51 = vmatpush1.msra.mxu0 0.0
    %52 = vmatprep.subr.mxu0 0.0
    %53 = vmatpush1.msra.mxu0 0.0
    %54 = vmatprep.subr.mxu0 0.0
    %55 = vmatpush1.msra.mxu0 0.0
    %56 = vmatprep.subr.mxu0 0.0
    %57 = vmatpush1.msra.mxu0 0.0
    %58 = vmatprep.subr.mxu0 0.0
    %59 = vmatpush1.msra.mxu0 0.0
    %60 = vmatprep.subr.mxu0 0.0
    %61 = vmatpush1.msra.mxu0 0.0
    %62 = vmatprep.subr.mxu0 0.0
    %63 = vmatpush1.msra.mxu0 %v24
    %64 = vmatprep.subr.mxu0 0.0
    %65 = vmatpush1.msra.mxu0 %v23
    %66 = vmatprep.subr.mxu0 0.0
    %67 = vmatpush1.msra.mxu0 %v22
    %68 = vmatprep.subr.mxu0 0.0
    %69 = vmatpush2.msra.mxu0 0.0
    %70 = vmatprep.subr.mxu0 0.0
    %71 = vmatpush2.msra.mxu0 0.0
    %72 = vmatprep.subr.mxu0 0.0
    %73 = vmatpush2.msra.mxu0 0.0
    %74 = vmatprep.subr.mxu0 0.0
    %75 = vmatpush2.msra.mxu0 0.0
    %76 = vmatprep.subr.mxu0 0.0
    %77 = vmatpush2.msra.mxu0 0.0
    %78 = vmatprep.subr.mxu0 0.0
    %79 = vmatpush2.msra.mxu0 0.0
    %80 = vmatprep.subr.mxu0 0.0
    %81 = vmatpush2.msra.mxu0 0.0
    %82 = vmatprep.subr.mxu0 0.0
    %83 = vmatpush2.msra.mxu0 0.0
    %84 = vmatprep.subr.mxu0 0.0
    %85 = vmatpush2.msra.mxu0 0.0
    %86 = vmatprep.subr.mxu0 0.0
    %87 = vmatpush2.msra.mxu0 0.0
    %88 = vmatprep.subr.mxu0 0.0
    %89 = vmatpush2.msra.mxu0 0.0
    %90 = vmatprep.subr.mxu0 0.0
    %91 = vmatpush2.msra.mxu0 0.0
    %92 = vmatprep.subr.mxu0 0.0
    %93 = vmatpush2.msra.mxu0 0.0
    %94 = vmatprep.subr.mxu0 0.0
    %95 = vmatpush2.msra.mxu0 0.0
    %96 = vmatprep.subr.mxu0 0.0
    %97 = vmatpush2.msra.mxu0 0.0
    %98 = vmatprep.subr.mxu0 0.0
    %99 = vmatpush2.msra.mxu0 0.0
    %100 = vmatprep.mubr.f32.mxu0 0.0
    %101 = vmatmul.mubr.f32.gmra.mxu0 %v34
    %v102 = vpop.f32.mrf.mxu0
    %v103 = vadd.f32 %v30, %v102
    %v104 = vpop.f32.mrf.mxu0
    %105 = vdwg.mxu0
    %v106 = vmax.f32 %v103, 0.0
    %v107 = vld [vmem:[%s3] sm:$0xff]
    %v108 = vld [vmem:[%s3 + $0x8] sm:$0xff]
    %v109 = vld [vmem:[%s3 + $0x10] sm:$0xff]
    %v110 = vld [vmem:[%s3 + $0x18] sm:$0xff]
    %v111 = vld [vmem:[%s3 + $0x20] sm:$0xff]
    %v112 = vld [vmem:[%s3 + $0x28] sm:$0xff]
    %v113 = vld [vmem:[%s3 + $0x30] sm:$0xff]
    %v114 = vld [vmem:[%s3 + $0x38] sm:$0xff]
    %v115 = vld [vmem:[%s3 + $0x40] sm:$0xff]
    %v116 = vld [vmem:[%s4] sm:$0x1]
    %v118 = vlaneseq
    %v119 = vshrl.u32 %v118, 7
    %v120 = vsub.s32 0, %v119
    %v121 = vrot.slane %v116, %v120
    %vm123 = vcmask 588800
    %v125 = vsel %vm123, %v106, 0
    %127 = vmatprep.subr.mxu0 0.0
    %128 = vmatpush1.msra.mxu0 0.0
    %129 = vmatprep.subr.mxu0 0.0
    %130 = vmatpush1.msra.mxu0 0.0
    %131 = vmatprep.subr.mxu0 0.0
    %132 = vmatpush1.msra.mxu0 0.0
    %133 = vmatprep.subr.mxu0 0.0
    %134 = vmatpush1.msra.mxu0 0.0
    %135 = vmatprep.subr.mxu0 0.0
    %136 = vmatpush1.msra.mxu0 0.0
    %137 = vmatprep.subr.mxu0 0.0
    %138 = vmatpush1.msra.mxu0 0.0
    %139 = vmatprep.subr.mxu0 0.0
    %140 = vmatpush1.msra.mxu0 0.0
    %141 = vmatprep.subr.mxu0 0.0
    %142 = vmatpush1.msra.mxu0 %v115
    %143 = vmatprep.subr.mxu0 0.0
    %144 = vmatpush1.msra.mxu0 %v114
    %145 = vmatprep.subr.mxu0 0.0
    %146 = vmatpush1.msra.mxu0 %v113
    %147 = vmatprep.subr.mxu0 0.0
    %148 = vmatpush1.msra.mxu0 %v112
    %149 = vmatprep.subr.mxu0 0.0
    %150 = vmatpush1.msra.mxu0 %v111
    %151 = vmatprep.subr.mxu0 0.0
    %152 = vmatpush1.msra.mxu0 %v110
    %153 = vmatprep.subr.mxu0 0.0
    %154 = vmatpush1.msra.mxu0 %v109
    %155 = vmatprep.subr.mxu0 0.0
    %156 = vmatpush1.msra.mxu0 %v108
    %157 = vmatprep.subr.mxu0 0.0
    %158 = vmatpush1.msra.mxu0 %v107
    %159 = vmatprep.subr.mxu0 0.0
    %160 = vmatpush2.msra.mxu0 0.0
    %161 = vmatprep.subr.mxu0 0.0
    %162 = vmatpush2.msra.mxu0 0.0
    %163 = vmatprep.subr.mxu0 0.0
    %164 = vmatpush2.msra.mxu0 0.0
    %165 = vmatprep.subr.mxu0 0.0
    %166 = vmatpush2.msra.mxu0 0.0
    %167 = vmatprep.subr.mxu0 0.0
    %168 = vmatpush2.msra.mxu0 0.0
    %169 = vmatprep.subr.mxu0 0.0
    %170 = vmatpush2.msra.mxu0 0.0
    %171 = vmatprep.subr.mxu0 0.0
    %172 = vmatpush2.msra.mxu0 0.0
    %173 = vmatprep.subr.mxu0 0.0
    %174 = vmatpush2.msra.mxu0 0.0
    %175 = vmatprep.subr.mxu0 0.0
    %176 = vmatpush2.msra.mxu0 0.0
    %177 = vmatprep.subr.mxu0 0.0
    %178 = vmatpush2.msra.mxu0 0.0
    %179 = vmatprep.subr.mxu0 0.0
    %180 = vmatpush2.msra.mxu0 0.0
    %181 = vmatprep.subr.mxu0 0.0
    %182 = vmatpush2.msra.mxu0 0.0
    %183 = vmatprep.subr.mxu0 0.0
    %184 = vmatpush2.msra.mxu0 0.0
    %185 = vmatprep.subr.mxu0 0.0
    %186 = vmatpush2.msra.mxu0 0.0
    %187 = vmatprep.subr.mxu0 0.0
    %188 = vmatpush2.msra.mxu0 0.0
    %189 = vmatprep.subr.mxu0 0.0
    %190 = vmatpush2.msra.mxu0 0.0
    %191 = vmatprep.mubr.f32.mxu0 0.0
    %192 = vmatmul.mubr.f32.gmra.mxu0 %v125
    %v193 = vpop.f32.mrf.mxu0
    %v194 = vadd.f32 %v121, %v193
    %v195 = vpop.f32.mrf.mxu0
    %196 = vdwg.mxu0
    %vm197 = vcmask 64512
    %198 = vst.msk [vmem:[#allocation2] sm:$0xff] %vm197, %v194
    // Predicated region
    $region22: #{tpu_custom_call.1} parent=1 // pred_check
      _
    $region23: #{tpu_custom_call.1} parent=1 // pred_check_branch
      %200 = sbr.rel (0) target = $region25
    $region24: #{tpu_custom_call.1} parent=1 // pred_region
      %s202 = ssub.s32 128, 128
      %203 = vsyncadd [#allocation3], %s202
      %s205 = sshll.u32 [#allocation2], 4
      %s206 = int_to_ptr.vmem [resolvable:$true] %s205
      %208 = dma.vmem_to_hbm [thread:$0]  %s206, 128, %s5, [#allocation3]
    $region25: #{tpu_custom_call.1} parent=1 // pred_fallthru
      _
    // Predicated region
    $region26: #{tpu_custom_call.1} parent=1 // pred_check
      _
    $region27: #{tpu_custom_call.1} parent=1 // pred_check_branch
      %210 = sbr.rel (0) target = $region29
    $region28: #{tpu_custom_call.1} parent=1 // pred_region
      %211 = dma.done [#allocation3], 128
    $region29: #{tpu_custom_call.1} parent=1 // pred_fallthru
      _
    %212 = vsyncpa [#allocation3], 1

</llo_original>
